<compile_context>
chip_gen: v7x
topology: tpu7x:2x2x1
jax: 0.10.0
libtpu: 0.0.40
codegen_flags: <defaults>
</compile_context>

<pallas_src>
import math
from functools import partial

import numpy as np
import jax
import jax.numpy as jnp
from jax.experimental import pallas as pl
from jax.experimental.pallas import tpu as pltpu


def _timestep_embed_kernel(t_ref, out_ref, *, half, max_period):
    """Sinusoidal timestep embedding for one row-tile of flattened scalars.

    t_ref:   (TN, 1)       f32 VMEM  -- flattened (b*d) conditioning scalars
    out_ref: (TN, outdim)  f32 VMEM  -- [cos(t*freqs), sin(t*freqs)] per row
    """
    t = t_ref[...]                                                 # (TN, 1)
    # Frequencies computed in-register: iota (VPU) + exp (EUP).  No table DMA,
    # no one-hot, no matmul.
    idx = jax.lax.broadcasted_iota(jnp.int32, (1, half), 1).astype(jnp.float32)
    freqs = jnp.exp(idx * jnp.float32(-math.log(max_period) / half))  # (1, half)
    args = t * freqs                                               # (TN, half)
    parts = [jnp.cos(args), jnp.sin(args)]
    pad = out_ref.shape[1] - 2 * half                              # odd-outdim zero col
    if pad:
        parts.append(jnp.zeros((t.shape[0], pad), jnp.float32))
    out_ref[...] = jnp.concatenate(parts, axis=-1).astype(out_ref.dtype)


def concat_timestep_embedder_nd(x, outdim, *, max_period=10000.0, row_tile=256):
    """Mirrors ConcatTimestepEmbedderND.forward."""
    if x.ndim == 1:
        x = x[:, None]
    assert x.ndim == 2
    b, dims = x.shape
    half = outdim // 2

    n = b * dims
    t = x.reshape(n, 1).astype(jnp.float32)                        # 'b d -> (b d)'

    # Whole problem in one grid step when it fits; otherwise tile rows.
    if n <= row_tile:
        tile, n_pad = n, n
    else:
        tile = row_tile
        n_pad = pl.cdiv(n, tile) * tile
        t = jnp.pad(t, ((0, n_pad - n), (0, 0)))

    emb = pl.pallas_call(
        partial(_timestep_embed_kernel, half=half, max_period=max_period),
        out_shape=jax.ShapeDtypeStruct((n_pad, outdim), jnp.float32),
        grid=(n_pad // tile,),
        in_specs=[pl.BlockSpec((tile, 1), lambda i: (i, 0))],
        out_specs=pl.BlockSpec((tile, outdim), lambda i: (i, 0)),
        compiler_params=pltpu.CompilerParams(
            dimension_semantics=("parallel",)),
    )(t)

    emb = emb[:n]                                                  # (b*dims, outdim)
    # '(b d) d2 -> b (d d2)' is a contiguous row-major reshape (free, wrapper-side).
    return emb.reshape(b, dims * outdim)


def _reference(x, outdim, max_period=10000.0):
    """Pure-JAX reference matching the torch Timestep / rearrange semantics."""
    if x.ndim == 1:
        x = x[:, None]
    b, dims = x.shape
    half = outdim // 2
    t = x.reshape(b * dims).astype(jnp.float32)
    freqs = jnp.exp(-math.log(max_period)
                    * jnp.arange(half, dtype=jnp.float32) / half)
    args = t[:, None] * freqs[None, :]
    emb = jnp.concatenate([jnp.cos(args), jnp.sin(args)], axis=-1)
    if outdim % 2:
        emb = jnp.concatenate([emb, jnp.zeros_like(emb[:, :1])], axis=-1)
    return emb.reshape(b, dims * outdim)


if __name__ == "__main__":
    key = jax.random.PRNGKey(0)
    batch, dims, outdim = 2, 4, 32

    # Conditioning scalars (e.g. SDXL original_size / crop coords style values).
    x = jax.random.uniform(key, (batch, dims), jnp.float32, 0.0, 1024.0)

    out = jax.block_until_ready(concat_timestep_embedder_nd(x, outdim))
    assert out.shape == (batch, dims * outdim), out.shape

    ref = _reference(x, outdim)
    np.testing.assert_allclose(np.asarray(out), np.asarray(ref),
                               rtol=1e-3, atol=1e-3)

    # 1-D input path (x.ndim == 1 branch of the module).
    x1 = jax.random.uniform(jax.random.PRNGKey(1), (batch,), jnp.float32,
                            0.0, 1024.0)
    out1 = jax.block_until_ready(concat_timestep_embedder_nd(x1, outdim))
    assert out1.shape == (batch, outdim), out1.shape
    np.testing.assert_allclose(np.asarray(out1),
                               np.asarray(_reference(x1, outdim)),
                               rtol=1e-3, atol=1e-3)

    print("KERNEL_OK")
</pallas_src>

<mosaic_0001>
module attributes {stable_mosaic.version = 11 : i64} {
  func.func @_timestep_embed_kernel(%arg0: i32, %arg1: memref<8x1xf32, #tpu.memory_space<vmem>>, %arg2: memref<8x32xf32, #tpu.memory_space<vmem>>) attributes {dimension_semantics = [#tpu.dimension_semantics<parallel>], iteration_bounds = array<i64: 1>, scalar_prefetch = 0 : i64, scratch_operands = 0 : i64, tpu.core_type = #tpu.core_type<tc>, window_params = [{transform_indices = @transform_0, window_bounds = array<i64: 8, 1>}, {transform_indices = @transform_1, window_bounds = array<i64: 8, 32>}]} {
    %c0 = arith.constant 0 : index
    %c0_0 = arith.constant 0 : index
    %0 = vector.load %arg1[%c0, %c0_0] : memref<8x1xf32, #tpu.memory_space<vmem>>, vector<8x1xf32>
    %1 = tpu.iota {dimensions = array<i32: 1>} : vector<1x16xi32>
    %2 = arith.sitofp %1 : vector<1x16xi32> to vector<1x16xf32>
    %cst = arith.constant -0.575646281 : f32
    %3 = vector.broadcast %cst : f32 to vector<1x16xf32>
    %4 = arith.mulf %2, %3 : vector<1x16xf32>
    %5 = math.exp %4 : vector<1x16xf32>
    %6 = vector.broadcast %0 : vector<8x1xf32> to vector<8x16xf32>
    %7 = vector.broadcast %5 : vector<1x16xf32> to vector<8x16xf32>
    %8 = arith.mulf %6, %7 : vector<8x16xf32>
    %9 = math.cos %8 : vector<8x16xf32>
    %10 = math.sin %8 : vector<8x16xf32>
    %11 = tpu.concatenate %9, %10 in 1 : vector<8x16xf32>, vector<8x16xf32> -> vector<8x32xf32>
    %c0_1 = arith.constant 0 : index
    %c0_2 = arith.constant 0 : index
    %12 = vector.load %arg2[%c0_1, %c0_2] : memref<8x32xf32, #tpu.memory_space<vmem>>, vector<8x32xf32>
    tpu.vector_store %arg2[%c0_1, %c0_2], %11 {strides = array<i32>} : memref<8x32xf32, #tpu.memory_space<vmem>>, vector<8x32xf32>,
    return
  }
  func.func @transform_0(%arg0: i32) -> (i32, i32) {
    %c0_i32 = arith.constant 0 : i32
    %c0_i32_0 = arith.constant 0 : i32
    return %arg0, %c0_i32 : i32, i32
  }
  func.func @transform_1(%arg0: i32) -> (i32, i32) {
    %c0_i32 = arith.constant 0 : i32
    %c0_i32_0 = arith.constant 0 : i32
    return %arg0, %c0_i32 : i32, i32
  }
}

</mosaic_0001>

<llo_original>
// kernel: tpu_custom_call.1
$region0: #{tpu_custom_call.1}
  #allocation0 [shape = 'u32[]', space=smem, size = 0x4, offset = 0x4, fixed_abs, tag = 'smem constant byte address 0x4 - core index']
  #allocation1 [shape = 'u32[144,128]{1,0:T(1,128)}', space=vmem, size = 0x12000, scoped, tag = 'internal scratch']
  %s0 = inlined_call_operand.vmem [shape: f32[8,1], index: 0, kind: input, shape index: {}]
  %s1 = inlined_call_operand.hbm [shape: f32[8,32], index: 1, kind: output, shape index: {}]
  %s2 = sld [smem:[#allocation0]]
  $region14: #{tpu_custom_call.1} parent=0
    _
  %s4 = ssub.s32 1, %s2
  %s5 = scalar_select 0, %s4, %s2
  $region1: #{tpu_custom_call.1} parent=0
    #allocation2 [shape = 'u8[4096]{0}', space=vmem, size = 0x1000, scoped, tag = 'output window, operand 0, single buffered']
    #allocation3 [shape = 's32[1]{0}', space=sflag, size = 0x4, scoped, tag = 'scoped memory for tpu_custom_call.1']
    %6 = vsyncpa [#allocation3], 0
    // Predicated region
    $region2: #{tpu_custom_call.1} parent=1 // pred_check
      _
    $region3: #{tpu_custom_call.1} parent=1 // pred_check_branch
      %8 = sbr.rel (0) target = $region5
    $region4: #{tpu_custom_call.1} parent=1 // pred_region
      _
    $region5: #{tpu_custom_call.1} parent=1 // pred_fallthru
      _
    %v9 = vld [vmem:[%s0] sm:$0xff]
    %v10 = vlaneseq
    %v11 = vand.u32 %v10, 127
    %v12 = vcvt.s32.f32 %v11
    %v13 = vmul.f32 %v12, -0.5756463
    %v14 = vmul.f32 %v13, 1.442695
    %v15 = vpow.pop %v14
    %17 = vset.pattern.permute.xlu0 0
    %18 = vperm.xlu0 %17, %v9
    %v19 = vpop.permute.xlu0 %18
    %v21 = vmul.f32 %v19, %v15
    %v22 = vand.u32 2147483647, %v21
    %vm23 = vcmp.le.f32.partialorder %v22, 0.7853982
    %vm24 = vcmp.lt.s32.totalorder %v21, 0
    %v25 = vand.u32 %v21, 2139095040
    %v26 = vshrl.u32 %v25, 23
    %v27 = vsub.s32 %v26, 127
    %v28 = vand.u32 2147483647, %v21
    %v29 = vand.u32 %v28, 8388607
    %v30 = vor.u32 %v29, 8388608
    %v31 = vsub.s32 0, %v30
    %v32 = vadd.s32 %v27, 1
    %vm33 = vcmp.gt.s32.totalorder %v32, 0
    %v34 = vsel %vm33, %v32, 0
    %v35 = vshrl.u32 %v34, 5
    %v36 = vand.u32 %v34, 31
    %v37 = vsub.s32 32, %v36
    %v38 = vshrl.u32 683565275, %v37
    %v39 = vshll.u32 683565275, %v36
    %v40 = vshrl.u32 2475754826, %v37
    %v41 = vor.u32 %v39, %v40
    %v42 = vshll.u32 2475754826, %v36
    %v43 = vshrl.u32 2131351028, %v37
    %v44 = vor.u32 %v42, %v43
    %v45 = vshll.u32 2131351028, %v36
    %v46 = vshrl.u32 2102212464, %v37
    %v47 = vor.u32 %v45, %v46
    %v48 = vshll.u32 2102212464, %v36
    %v49 = vshrl.u32 920167782, %v37
    %v50 = vor.u32 %v48, %v49
    %v51 = vshll.u32 920167782, %v36
    %v52 = vshrl.u32 1326507024, %v37
    %v53 = vor.u32 %v51, %v52
    %vm54 = vcmp.lt.s32.totalorder %v35, 1
    %vm55 = vcmp.lt.s32.totalorder %v35, 2
    %vm56 = vcmp.lt.s32.totalorder %v35, 3
    %vm57 = vcmp.lt.s32.totalorder %v35, 4
    %v58 = vsel %vm54, %v38, %v41
    %v59 = vsel %vm57, %v47, 2102212464
    %v60 = vsel %vm56, %v44, %v59
    %v61 = vsel %vm55, %v58, %v60
    %v62 = vsel %vm54, %v41, %v44
    %v63 = vsel %vm57, %v50, 920167782
    %v64 = vsel %vm56, %v47, %v63
    %v65 = vsel %vm55, %v62, %v64
    %v66 = vsel %vm54, %v44, %v47
    %v67 = vsel %vm57, %v53, 1326507024
    %v68 = vsel %vm56, %v50, %v67
    %v69 = vsel %vm55, %v66, %v68
    %v70 = vshll.u32 %v30, 8
    %v71 = vmul.u32.u64.compose %v70, %v69
    %v72 = vextract.low.u32 %v71
    %v73 = vextract.high.u32 %v71
    %v74 = vmul.u32.u64.compose %v70, %v65
    %v75 = vextract.low.u32 %v74
    %v76 = vextract.high.u32 %v74
    %v77 = vmul.u32 %v70, %v61
    %v78 = vadd.s32 %v73, %v75
    %vm79 = vc.u32 %v73, %v75
    %v80 = vadd.s32 %v76, 1
    %v81 = vsel %vm79, %v80, %v76
    %v82 = vadd.s32 %v77, %v81
    %v83 = vadd.s32 %v82, 536870912
    %v84 = vshrl.u32 %v83, 30
    %v85 = vshll.u32 %v84, 30
    %v86 = vsub.s32 %v82, %v85
    %vm87 = vcmp.lt.s32.totalorder %v86, 0
    %v88 = vsub.s32 0, %v86
    %v89 = vsel %vm87, %v88, %v86
    %v90 = vclz %v89
    %v91 = vsub.s32 %v90, 2
    %vm92 = vcmp.gt.s32.totalorder 0, %v91
    %v93 = vsel %vm92, 0, %v91
    %v94 = vsub.s32 32, %v93
    %v95 = vshll.u32 %v86, %v93
    %v96 = vshrl.u32 %v78, %v94
    %v97 = vor.u32 %v95, %v96
    %v98 = vsub.s32 4294967266, %v93
    %v99 = vadd.s32 %v98, 127
    %v100 = vshll.u32 %v99, 23
    %v101 = vor.u32 4788187, %v100
    %v102 = vand.u32 2147483647, %v101
    %v104 = vcvt.s32.f32 %v97
    %v105 = vmul.f32 %v104, %v102
    %v106 = vxor.u32 %v105, 2147483648
    %v107 = vsel %vm24, %v106, %v105
    %v108 = vsub.s32 4, %v84
    %v109 = vsel %vm24, %v108, %v84
    %v110 = vsel %vm23, %v21, %v107
    %v111 = vsel %vm23, 0, %v109
    %v112 = vcosq.f32.pop %v110
    %v113 = vsinq.f32.pop %v110
    %vm114 = vweird.f32 %v21
    %v115 = vand.u32 %v111, 3
    %vm116 = vcmp.lt.s32.totalorder %v115, 2
    %vm117 = vcmp.eq.s32.totalorder %v115, 0
    %v118 = vxor.u32 %v113, 2147483648
    %v119 = vsel %vm117, %v112, %v118
    %vm120 = vcmp.eq.s32.totalorder %v115, 2
    %v121 = vxor.u32 %v112, 2147483648
    %v122 = vsel %vm120, %v121, %v113
    %v123 = vsel %vm116, %v119, %v122
    %v124 = vsel %vm114, nan, %v123
    %v125 = vand.u32 2147483647, %v21
    %vm126 = vcmp.le.f32.partialorder %v125, 0.7853982
    %vm127 = vcmp.lt.s32.totalorder %v21, 0
    %v128 = vand.u32 %v21, 2139095040
    %v129 = vshrl.u32 %v128, 23
    %v130 = vsub.s32 %v129, 127
    %v131 = vand.u32 2147483647, %v21
    %v132 = vand.u32 %v131, 8388607
    %v133 = vor.u32 %v132, 8388608
    %v134 = vsub.s32 0, %v133
    %v135 = vadd.s32 %v130, 1
    %vm136 = vcmp.gt.s32.totalorder %v135, 0
    %v137 = vsel %vm136, %v135, 0
    %v138 = vshrl.u32 %v137, 5
    %v139 = vand.u32 %v137, 31
    %v140 = vsub.s32 32, %v139
    %v141 = vshrl.u32 683565275, %v140
    %v142 = vshll.u32 683565275, %v139
    %v143 = vshrl.u32 2475754826, %v140
    %v144 = vor.u32 %v142, %v143
    %v145 = vshll.u32 2475754826, %v139
    %v146 = vshrl.u32 2131351028, %v140
    %v147 = vor.u32 %v145, %v146
    %v148 = vshll.u32 2131351028, %v139
    %v149 = vshrl.u32 2102212464, %v140
    %v150 = vor.u32 %v148, %v149
    %v151 = vshll.u32 2102212464, %v139
    %v152 = vshrl.u32 920167782, %v140
    %v153 = vor.u32 %v151, %v152
    %v154 = vshll.u32 920167782, %v139
    %v155 = vshrl.u32 1326507024, %v140
    %v156 = vor.u32 %v154, %v155
    %vm157 = vcmp.lt.s32.totalorder %v138, 1
    %vm158 = vcmp.lt.s32.totalorder %v138, 2
    %vm159 = vcmp.lt.s32.totalorder %v138, 3
    %vm160 = vcmp.lt.s32.totalorder %v138, 4
    %v161 = vsel %vm157, %v141, %v144
    %v162 = vsel %vm160, %v150, 2102212464
    %v163 = vsel %vm159, %v147, %v162
    %v164 = vsel %vm158, %v161, %v163
    %v165 = vsel %vm157, %v144, %v147
    %v166 = vsel %vm160, %v153, 920167782
    %v167 = vsel %vm159, %v150, %v166
    %v168 = vsel %vm158, %v165, %v167
    %v169 = vsel %vm157, %v147, %v150
    %v170 = vsel %vm160, %v156, 1326507024
    %v171 = vsel %vm159, %v153, %v170
    %v172 = vsel %vm158, %v169, %v171
    %v173 = vshll.u32 %v133, 8
    %v174 = vmul.u32.u64.compose %v173, %v172
    %v175 = vextract.low.u32 %v174
    %v176 = vextract.high.u32 %v174
    %v177 = vmul.u32.u64.compose %v173, %v168
    %v178 = vextract.low.u32 %v177
    %v179 = vextract.high.u32 %v177
    %v180 = vmul.u32 %v173, %v164
    %v181 = vadd.s32 %v176, %v178
    %vm182 = vc.u32 %v176, %v178
    %v183 = vadd.s32 %v179, 1
    %v184 = vsel %vm182, %v183, %v179
    %v185 = vadd.s32 %v180, %v184
    %v186 = vadd.s32 %v185, 536870912
    %v187 = vshrl.u32 %v186, 30
    %v188 = vshll.u32 %v187, 30
    %v189 = vsub.s32 %v185, %v188
    %vm190 = vcmp.lt.s32.totalorder %v189, 0
    %v191 = vsub.s32 0, %v189
    %v192 = vsel %vm190, %v191, %v189
    %v193 = vclz %v192
    %v194 = vsub.s32 %v193, 2
    %vm195 = vcmp.gt.s32.totalorder 0, %v194
    %v196 = vsel %vm195, 0, %v194
    %v197 = vsub.s32 32, %v196
    %v198 = vshll.u32 %v189, %v196
    %v199 = vshrl.u32 %v181, %v197
    %v200 = vor.u32 %v198, %v199
    %v201 = vsub.s32 4294967266, %v196
    %v202 = vadd.s32 %v201, 127
    %v203 = vshll.u32 %v202, 23
    %v204 = vor.u32 4788187, %v203
    %v205 = vand.u32 2147483647, %v204
    %v207 = vcvt.s32.f32 %v200
    %v208 = vmul.f32 %v207, %v205
    %v209 = vxor.u32 %v208, 2147483648
    %v210 = vsel %vm127, %v209, %v208
    %v211 = vsub.s32 4, %v187
    %v212 = vsel %vm127, %v211, %v187
    %v213 = vsel %vm126, %v21, %v210
    %v214 = vsel %vm126, 0, %v212
    %v215 = vcosq.f32.pop %v213
    %v216 = vsinq.f32.pop %v213
    %vm217 = vweird.f32 %v21
    %v218 = vadd.s32 %v214, 3
    %v219 = vand.u32 %v218, 3
    %vm220 = vcmp.lt.s32.totalorder %v219, 2
    %vm221 = vcmp.eq.s32.totalorder %v219, 0
    %v222 = vxor.u32 %v216, 2147483648
    %v223 = vsel %vm221, %v215, %v222
    %vm224 = vcmp.eq.s32.totalorder %v219, 2
    %v225 = vxor.u32 %v215, 2147483648
    %v226 = vsel %vm224, %v225, %v216
    %v227 = vsel %vm220, %v223, %v226
    %v228 = vsel %vm217, nan, %v227
    %230 = vrot.lane.b32.xlu0 %v228, 16
    %v231 = vpop.permute.xlu0 %230
    %vm233 = vcmask 130048
    %v234 = vsel %vm233, %v124, %v231
    %vm235 = vcmask 261120
    %236 = vst.msk [vmem:[#allocation2] sm:$0xff] %vm235, %v234
    // Predicated region
    $region6: #{tpu_custom_call.1} parent=1 // pred_check
      _
    $region7: #{tpu_custom_call.1} parent=1 // pred_check_branch
      %238 = sbr.rel (0) target = $region9
    $region8: #{tpu_custom_call.1} parent=1 // pred_region
      %s240 = ssub.s32 128, 128
      %241 = vsyncadd [#allocation3], %s240
      %s243 = sshll.u32 [#allocation2], 4
      %s244 = int_to_ptr.vmem [resolvable:$true] %s243
      %246 = dma.vmem_to_hbm [thread:$0]  %s244, 128, %s1, [#allocation3]
    $region9: #{tpu_custom_call.1} parent=1 // pred_fallthru
      _
    // Predicated region
    $region10: #{tpu_custom_call.1} parent=1 // pred_check
      _
    $region11: #{tpu_custom_call.1} parent=1 // pred_check_branch
      %248 = sbr.rel (0) target = $region13
    $region12: #{tpu_custom_call.1} parent=1 // pred_region
      %249 = dma.done [#allocation3], 128
    $region13: #{tpu_custom_call.1} parent=1 // pred_fallthru
      _
    %250 = vsyncpa [#allocation3], 1

</llo_original>
